<compile_context>
chip_gen: v7x
topology: tpu7x:2x2x1
jax: 0.10.0
libtpu: 0.0.40
codegen_flags: <defaults>
</compile_context>

<pallas_src>
import numpy as np
import jax
import jax.numpy as jnp
from jax.experimental import pallas as pl
from jax.experimental.pallas import tpu as pltpu

# 5x5 Laplace ("edge") kernel and mask-dilation kernel from LaplaceFilter_5D.
EDGE_K = np.array(
    [[0, 0, 1, 0, 0],
     [0, 1, 2, 1, 0],
     [1, 2, -16, 2, 1],
     [0, 1, 2, 1, 0],
     [0, 0, 1, 0, 0]], dtype=np.float32)

MASK_K = np.array(
    [[0, 0, 0.077, 0, 0],
     [0, 0.077, 0.077, 0.077, 0],
     [0.077, 0.077, 0.077, 0.077, 0.077],
     [0, 0.077, 0.077, 0.077, 0],
     [0, 0, 0.077, 0, 0]], dtype=np.float32)


def _round_up(a, m):
    return -(-a // m) * m


def _w_masks(H, W):
    """(4, H*W) f32 horizontal-validity masks: rows = [w>=2, w>=1, w<=W-2, w<=W-3]."""
    w = np.arange(H * W, dtype=np.int64) % W
    m = np.stack([(w >= 2), (w >= 1), (w <= W - 2), (w <= W - 3)])
    return jnp.asarray(m.astype(np.float32))


def _make_kernel(H, W, TB, OFFSET, FP, with_mask):
    """Kernel factory.

    Scratch layout per batch row (lane axis, length FP = 2*OFFSET + H*W):
      [ 0 .. OFFSET )          zero halo (covers rows -2,-1 of the image)
      [ OFFSET .. OFFSET+H*W ) image pixels, flattened row-major
      [ OFFSET+H*W .. FP )     zero halo (covers rows H, H+1)
    A 5x5 tap (di, dj) of the zero-padded conv is then the lane slice starting
    at BASE + di*W + dj (BASE = OFFSET - 2*W - 2), with horizontal row-wrap
    contributions removed by the 0/1 column masks.
    """
    HW = H * W
    BASE = OFFSET - (2 * W + 2)

    def tap(ref, di, dj):
        s = BASE + di * W + dj
        return ref[:, s:s + HW]

    def fill(scratch_ref, in_ref):
        # Zero only the halos (left halo is a full lane-aligned region), then
        # copy the interior at a 128-lane aligned offset (unmasked stores).
        scratch_ref[:, :OFFSET] = jnp.zeros((TB, OFFSET), jnp.float32)
        scratch_ref[:, OFFSET + HW:] = jnp.zeros((TB, OFFSET), jnp.float32)
        scratch_ref[:, OFFSET:OFFSET + HW] = in_ref[...].astype(jnp.float32)

    def edge(xp_ref, m0, m1, m3, m4):
        # Laplace kernel grouped by column (= horizontal offset), weight-shared.
        c2 = ((tap(xp_ref, 0, 2) + tap(xp_ref, 4, 2))
              + 2.0 * (tap(xp_ref, 1, 2) + tap(xp_ref, 3, 2))
              - 16.0 * tap(xp_ref, 2, 2))
        c1 = (tap(xp_ref, 1, 1) + tap(xp_ref, 3, 1)) + 2.0 * tap(xp_ref, 2, 1)
        c3 = (tap(xp_ref, 1, 3) + tap(xp_ref, 3, 3)) + 2.0 * tap(xp_ref, 2, 3)
        return (c2 + m1 * c1 + m3 * c3
                + m0 * tap(xp_ref, 2, 0) + m4 * tap(xp_ref, 2, 4))

    def diamond(mp_ref, m0, m1, m3, m4):
        # All 13 diamond taps share weight 0.077 -> factor it out of the sum.
        d2 = (tap(mp_ref, 0, 2) + tap(mp_ref, 1, 2) + tap(mp_ref, 2, 2)
              + tap(mp_ref, 3, 2) + tap(mp_ref, 4, 2))
        d1 = tap(mp_ref, 1, 1) + tap(mp_ref, 2, 1) + tap(mp_ref, 3, 1)
        d3 = tap(mp_ref, 1, 3) + tap(mp_ref, 2, 3) + tap(mp_ref, 3, 3)
        msum = (d2 + m1 * d1 + m3 * d3
                + m0 * tap(mp_ref, 2, 0) + m4 * tap(mp_ref, 2, 4))
        return jnp.where(0.077 * msum >= 0.95, 1.0, 0.0)

    if with_mask:
        def kernel(wm_ref, x_ref, m_ref, out_ref, omask_ref, xp_ref, mp_ref):
            m0 = wm_ref[0:1, :]
            m1 = wm_ref[1:2, :]
            m3 = wm_ref[2:3, :]
            m4 = wm_ref[3:4, :]
            fill(xp_ref, x_ref)
            fill(mp_ref, m_ref)
            lap = edge(xp_ref, m0, m1, m3, m4)
            bm = diamond(mp_ref, m0, m1, m3, m4)
            out_ref[...] = (lap * bm).astype(out_ref.dtype)
            omask_ref[...] = bm.astype(omask_ref.dtype)
        return kernel

    def kernel(wm_ref, x_ref, out_ref, xp_ref):
        m0 = wm_ref[0:1, :]
        m1 = wm_ref[1:2, :]
        m3 = wm_ref[2:3, :]
        m4 = wm_ref[3:4, :]
        fill(xp_ref, x_ref)
        out_ref[...] = edge(xp_ref, m0, m1, m3, m4).astype(out_ref.dtype)
    return kernel


def _pick_tb(B, HW, FP, itemsizes):
    """Pick batch-rows-per-block and a VMEM limit sized per TPU generation."""
    try:
        vmem_cap = int(pltpu.get_tpu_info().vmem_capacity_bytes)
    except Exception:
        vmem_cap = 64 * 1024 * 1024          # conservative (v7x per-TC)
    # Per batch-row VMEM estimate: double-buffered in/out blocks, two padded
    # f32 scratches, plus compiler temporaries (~6 x block in f32).
    io_bytes = 2 * sum(int(s) for s in itemsizes) * HW
    scratch_bytes = 2 * 4 * FP
    temp_bytes = 6 * 4 * HW
    per_row = io_bytes + scratch_bytes + temp_bytes
    budget = min(vmem_cap // 6, 8 * 1024 * 1024)
    tb_cap = max(8, (budget // per_row) // 8 * 8)
    tb = min(tb_cap, 256)                    # ~1-2 MiB HBM per grid step
    if B >= 128:                             # >=2 grid steps -> megacore/pipelining
        tb = min(tb, _round_up(-(-B // 2), 8))
    tb = max(8, min(tb, _round_up(B, 8)))
    tb = _round_up(tb, 8)
    vmem_limit = min(vmem_cap // 2, 64 * 1024 * 1024)
    return tb, vmem_limit


def laplace_filter_5d(x, mask=None):
    """Pallas port of LaplaceFilter_5D.forward.

    x, mask: (N, C, H, W). Returns (out, out_mask); out_mask is None when
    mask is None, matching the PyTorch module. out has x.dtype, out_mask has
    mask.dtype (conv2d preserves the input dtype in the PyTorch module too).
    """
    N, C, H, W = x.shape
    B = N * C
    HW = H * W
    OFFSET = _round_up(2 * W + 2, 128)       # lane-aligned start of image data
    FP = 2 * OFFSET + HW                     # scratch lane width incl. halos

    wm = _w_masks(H, W)                      # (4, HW) f32 constant
    x2 = x.reshape(B, HW)                    # free: contiguous reshape

    wm_spec = pl.BlockSpec((4, HW), lambda b: (0, 0))

    if mask is None:
        TB, vmem_limit = _pick_tb(B, HW, FP, (x.dtype.itemsize, x.dtype.itemsize))
        blk = pl.BlockSpec((TB, HW), lambda b: (b, 0))
        out2 = pl.pallas_call(
            _make_kernel(H, W, TB, OFFSET, FP, with_mask=False),
            out_shape=jax.ShapeDtypeStruct((B, HW), x.dtype),
            grid_spec=pltpu.PrefetchScalarGridSpec(
                num_scalar_prefetch=0,
                grid=(pl.cdiv(B, TB),),
                in_specs=[wm_spec, blk],
                out_specs=blk,
                scratch_shapes=[pltpu.VMEM((TB, FP), jnp.float32)]),
            compiler_params=pltpu.CompilerParams(
                dimension_semantics=("parallel",),
                vmem_limit_bytes=vmem_limit),
        )(wm, x2)
        return out2.reshape(N, C, H, W), None

    m2 = mask.reshape(B, HW)
    TB, vmem_limit = _pick_tb(
        B, HW, FP,
        (x.dtype.itemsize, mask.dtype.itemsize,
         x.dtype.itemsize, mask.dtype.itemsize))
    blk = pl.BlockSpec((TB, HW), lambda b: (b, 0))
    out2, omask2 = pl.pallas_call(
        _make_kernel(H, W, TB, OFFSET, FP, with_mask=True),
        out_shape=(jax.ShapeDtypeStruct((B, HW), x.dtype),
                   jax.ShapeDtypeStruct((B, HW), mask.dtype)),
        grid_spec=pltpu.PrefetchScalarGridSpec(
            num_scalar_prefetch=0,
            grid=(pl.cdiv(B, TB),),
            in_specs=[wm_spec, blk, blk],
            out_specs=[blk, blk],
            scratch_shapes=[pltpu.VMEM((TB, FP), jnp.float32),
                            pltpu.VMEM((TB, FP), jnp.float32)]),
        compiler_params=pltpu.CompilerParams(
            dimension_semantics=("parallel",),
            vmem_limit_bytes=vmem_limit),
    )(wm, x2, m2)
    return out2.reshape(N, C, H, W), omask2.reshape(N, C, H, W)


# ----------------------------- pure-JAX reference ---------------------------

def _conv5_same(img, k):
    """Per-tap-weight 'same' 5x5 conv with zero padding on (B, H, W)."""
    Bn, H, W = img.shape
    p = jnp.pad(img, ((0, 0), (2, 2), (2, 2)))
    out = jnp.zeros((Bn, H, W), jnp.float32)
    for di in range(5):
        for dj in range(5):
            w = float(k[di, dj])
            if w != 0.0:
                out = out + w * p[:, di:di + H, dj:dj + W]
    return out


def _reference(x, mask=None):
    N, C, H, W = x.shape
    B = N * C
    lap = _conv5_same(x.reshape(B, H, W).astype(jnp.float32), EDGE_K)
    if mask is None:
        return lap.reshape(N, C, H, W), None
    mc = _conv5_same(mask.reshape(B, H, W).astype(jnp.float32), MASK_K)
    bm = jnp.where(mc >= 0.95, 1.0, 0.0)
    return (lap * bm).reshape(N, C, H, W), bm.reshape(N, C, H, W)


if __name__ == "__main__":
    key = jax.random.PRNGKey(0)
    k1, k2, k3, k4 = jax.random.split(key, 4)
    N, C, H, W = 2, 4, 16, 16

    x = jax.random.normal(k1, (N, C, H, W), dtype=jnp.float32)
    mask = (jax.random.uniform(k2, (N, C, H, W)) > 0.1).astype(jnp.float32)

    # Masked path (the typical use inside the second-order-gradient loss).
    out, out_mask = laplace_filter_5d(x, mask)
    out = jax.block_until_ready(out)
    out_mask = jax.block_until_ready(out_mask)

    ref_out, ref_mask = _reference(x, mask)
    ref_out = jax.block_until_ready(ref_out)
    assert np.allclose(np.asarray(out_mask), np.asarray(ref_mask)), "out_mask mismatch"
    assert np.allclose(np.asarray(out), np.asarray(ref_out),
                       rtol=1e-4, atol=1e-4), "out mismatch"

    # mask=None path (edge conv only; out_mask is None, as in the module).
    out_nm, om_nm = laplace_filter_5d(x, None)
    out_nm = jax.block_until_ready(out_nm)
    ref_nm, _ = _reference(x, None)
    assert om_nm is None
    assert np.allclose(np.asarray(out_nm), np.asarray(ref_nm),
                       rtol=1e-4, atol=1e-4), "edge-only mismatch"

    # Larger batch: exercises a multi-block "parallel" grid (2 grid steps).
    xb = jax.random.normal(k3, (4, 32, H, W), dtype=jnp.float32)
    mb = (jax.random.uniform(k4, (4, 32, H, W)) > 0.2).astype(jnp.float32)
    ob, omb = laplace_filter_5d(xb, mb)
    ob = jax.block_until_ready(ob)
    rb, rmb = _reference(xb, mb)
    assert np.allclose(np.asarray(omb), np.asarray(rmb)), "big out_mask mismatch"
    assert np.allclose(np.asarray(ob), np.asarray(rb),
                       rtol=1e-4, atol=1e-4), "big out mismatch"

    print("KERNEL_OK")
</pallas_src>

<mosaic_0001>
module attributes {stable_mosaic.version = 11 : i64} {
  func.func @kernel(%arg0: i32, %arg1: memref<4x256xf32, #tpu.memory_space<vmem>>, %arg2: memref<8x256xf32, #tpu.memory_space<vmem>>, %arg3: memref<8x256xf32, #tpu.memory_space<vmem>>, %arg4: memref<8x256xf32, #tpu.memory_space<vmem>>, %arg5: memref<8x256xf32, #tpu.memory_space<vmem>>, %arg6: memref<8x512xf32, #tpu.memory_space<vmem>>, %arg7: memref<8x512xf32, #tpu.memory_space<vmem>>) attributes {dimension_semantics = [#tpu.dimension_semantics<parallel>], iteration_bounds = array<i64: 1>, scalar_prefetch = 0 : i64, scratch_operands = 2 : i64, tpu.core_type = #tpu.core_type<tc>, window_params = [{pipeline_mode = #tpu.pipeline_mode<synchronous>, transform_indices = @transform_0, window_bounds = array<i64: 4, 256>}, {transform_indices = @transform_1, window_bounds = array<i64: 8, 256>}, {transform_indices = @transform_2, window_bounds = array<i64: 8, 256>}, {transform_indices = @transform_3, window_bounds = array<i64: 8, 256>}, {transform_indices = @transform_4, window_bounds = array<i64: 8, 256>}]} {
    %c0 = arith.constant 0 : index
    %c0_0 = arith.constant 0 : index
    %0 = vector.load %arg1[%c0, %c0_0] : memref<4x256xf32, #tpu.memory_space<vmem>>, vector<1x256xf32>
    %c1 = arith.constant 1 : index
    %c0_1 = arith.constant 0 : index
    %1 = vector.load %arg1[%c1, %c0_1] : memref<4x256xf32, #tpu.memory_space<vmem>>, vector<1x256xf32>
    %c2 = arith.constant 2 : index
    %c0_2 = arith.constant 0 : index
    %2 = vector.load %arg1[%c2, %c0_2] : memref<4x256xf32, #tpu.memory_space<vmem>>, vector<1x256xf32>
    %c3 = arith.constant 3 : index
    %c0_3 = arith.constant 0 : index
    %3 = vector.load %arg1[%c3, %c0_3] : memref<4x256xf32, #tpu.memory_space<vmem>>, vector<1x256xf32>
    %cst = arith.constant 0.000000e+00 : f32
    %4 = vector.broadcast %cst : f32 to vector<8x128xf32>
    %c0_4 = arith.constant 0 : index
    %c0_5 = arith.constant 0 : index
    %5 = vector.load %arg6[%c0_4, %c0_5] : memref<8x512xf32, #tpu.memory_space<vmem>>, vector<8x128xf32>
    tpu.vector_store %arg6[%c0_4, %c0_5], %4 {strides = array<i32>} : memref<8x512xf32, #tpu.memory_space<vmem>>, vector<8x128xf32>,
    %cst_6 = arith.constant 0.000000e+00 : f32
    %6 = vector.broadcast %cst_6 : f32 to vector<8x128xf32>
    %c0_7 = arith.constant 0 : index
    %c384 = arith.constant 384 : index
    %7 = vector.load %arg6[%c0_7, %c384] : memref<8x512xf32, #tpu.memory_space<vmem>>, vector<8x128xf32>
    tpu.vector_store %arg6[%c0_7, %c384], %6 {strides = array<i32>} : memref<8x512xf32, #tpu.memory_space<vmem>>, vector<8x128xf32>,
    %c0_8 = arith.constant 0 : index
    %c0_9 = arith.constant 0 : index
    %8 = vector.load %arg2[%c0_8, %c0_9] : memref<8x256xf32, #tpu.memory_space<vmem>>, vector<8x256xf32>
    %c0_10 = arith.constant 0 : index
    %c128 = arith.constant 128 : index
    %9 = vector.load %arg6[%c0_10, %c128] : memref<8x512xf32, #tpu.memory_space<vmem>>, vector<8x256xf32>
    tpu.vector_store %arg6[%c0_10, %c128], %8 {strides = array<i32>} : memref<8x512xf32, #tpu.memory_space<vmem>>, vector<8x256xf32>,
    %cst_11 = arith.constant 0.000000e+00 : f32
    %10 = vector.broadcast %cst_11 : f32 to vector<8x128xf32>
    %c0_12 = arith.constant 0 : index
    %c0_13 = arith.constant 0 : index
    %11 = vector.load %arg7[%c0_12, %c0_13] : memref<8x512xf32, #tpu.memory_space<vmem>>, vector<8x128xf32>
    tpu.vector_store %arg7[%c0_12, %c0_13], %10 {strides = array<i32>} : memref<8x512xf32, #tpu.memory_space<vmem>>, vector<8x128xf32>,
    %cst_14 = arith.constant 0.000000e+00 : f32
    %12 = vector.broadcast %cst_14 : f32 to vector<8x128xf32>
    %c0_15 = arith.constant 0 : index
    %c384_16 = arith.constant 384 : index
    %13 = vector.load %arg7[%c0_15, %c384_16] : memref<8x512xf32, #tpu.memory_space<vmem>>, vector<8x128xf32>
    tpu.vector_store %arg7[%c0_15, %c384_16], %12 {strides = array<i32>} : memref<8x512xf32, #tpu.memory_space<vmem>>, vector<8x128xf32>,
    %c0_17 = arith.constant 0 : index
    %c0_18 = arith.constant 0 : index
    %14 = vector.load %arg3[%c0_17, %c0_18] : memref<8x256xf32, #tpu.memory_space<vmem>>, vector<8x256xf32>
    %c0_19 = arith.constant 0 : index
    %c128_20 = arith.constant 128 : index
    %15 = vector.load %arg7[%c0_19, %c128_20] : memref<8x512xf32, #tpu.memory_space<vmem>>, vector<8x256xf32>
    tpu.vector_store %arg7[%c0_19, %c128_20], %14 {strides = array<i32>} : memref<8x512xf32, #tpu.memory_space<vmem>>, vector<8x256xf32>,
    %c0_21 = arith.constant 0 : index
    %c96 = arith.constant 96 : index
    %16 = vector.load %arg6[%c0_21, %c96] : memref<8x512xf32, #tpu.memory_space<vmem>>, vector<8x256xf32>
    %c0_22 = arith.constant 0 : index
    %c160 = arith.constant 160 : index
    %17 = vector.load %arg6[%c0_22, %c160] : memref<8x512xf32, #tpu.memory_space<vmem>>, vector<8x256xf32>
    %18 = arith.addf %16, %17 : vector<8x256xf32>
    %c0_23 = arith.constant 0 : index
    %c112 = arith.constant 112 : index
    %19 = vector.load %arg6[%c0_23, %c112] : memref<8x512xf32, #tpu.memory_space<vmem>>, vector<8x256xf32>
    %c0_24 = arith.constant 0 : index
    %c144 = arith.constant 144 : index
    %20 = vector.load %arg6[%c0_24, %c144] : memref<8x512xf32, #tpu.memory_space<vmem>>, vector<8x256xf32>
    %21 = arith.addf %19, %20 : vector<8x256xf32>
    %cst_25 = arith.constant 2.000000e+00 : f32
    %22 = vector.broadcast %cst_25 : f32 to vector<8x256xf32>
    %23 = arith.mulf %22, %21 : vector<8x256xf32>
    %24 = arith.addf %18, %23 : vector<8x256xf32>
    %c0_26 = arith.constant 0 : index
    %c128_27 = arith.constant 128 : index
    %25 = vector.load %arg6[%c0_26, %c128_27] : memref<8x512xf32, #tpu.memory_space<vmem>>, vector<8x256xf32>
    %cst_28 = arith.constant 1.600000e+01 : f32
    %26 = vector.broadcast %cst_28 : f32 to vector<8x256xf32>
    %27 = arith.mulf %26, %25 : vector<8x256xf32>
    %28 = arith.subf %24, %27 : vector<8x256xf32>
    %c0_29 = arith.constant 0 : index
    %c111 = arith.constant 111 : index
    %29 = vector.load %arg6[%c0_29, %c111] : memref<8x512xf32, #tpu.memory_space<vmem>>, vector<8x256xf32>
    %c0_30 = arith.constant 0 : index
    %c143 = arith.constant 143 : index
    %30 = vector.load %arg6[%c0_30, %c143] : memref<8x512xf32, #tpu.memory_space<vmem>>, vector<8x256xf32>
    %31 = arith.addf %29, %30 : vector<8x256xf32>
    %c0_31 = arith.constant 0 : index
    %c127 = arith.constant 127 : index
    %32 = vector.load %arg6[%c0_31, %c127] : memref<8x512xf32, #tpu.memory_space<vmem>>, vector<8x256xf32>
    %cst_32 = arith.constant 2.000000e+00 : f32
    %33 = vector.broadcast %cst_32 : f32 to vector<8x256xf32>
    %34 = arith.mulf %33, %32 : vector<8x256xf32>
    %35 = arith.addf %31, %34 : vector<8x256xf32>
    %c0_33 = arith.constant 0 : index
    %c113 = arith.constant 113 : index
    %36 = vector.load %arg6[%c0_33, %c113] : memref<8x512xf32, #tpu.memory_space<vmem>>, vector<8x256xf32>
    %c0_34 = arith.constant 0 : index
    %c145 = arith.constant 145 : index
    %37 = vector.load %arg6[%c0_34, %c145] : memref<8x512xf32, #tpu.memory_space<vmem>>, vector<8x256xf32>
    %38 = arith.addf %36, %37 : vector<8x256xf32>
    %c0_35 = arith.constant 0 : index
    %c129 = arith.constant 129 : index
    %39 = vector.load %arg6[%c0_35, %c129] : memref<8x512xf32, #tpu.memory_space<vmem>>, vector<8x256xf32>
    %cst_36 = arith.constant 2.000000e+00 : f32
    %40 = vector.broadcast %cst_36 : f32 to vector<8x256xf32>
    %41 = arith.mulf %40, %39 : vector<8x256xf32>
    %42 = arith.addf %38, %41 : vector<8x256xf32>
    %43 = vector.broadcast %1 : vector<1x256xf32> to vector<8x256xf32>
    %44 = arith.mulf %43, %35 : vector<8x256xf32>
    %45 = arith.addf %28, %44 : vector<8x256xf32>
    %46 = vector.broadcast %2 : vector<1x256xf32> to vector<8x256xf32>
    %47 = arith.mulf %46, %42 : vector<8x256xf32>
    %48 = arith.addf %45, %47 : vector<8x256xf32>
    %c0_37 = arith.constant 0 : index
    %c126 = arith.constant 126 : index
    %49 = vector.load %arg6[%c0_37, %c126] : memref<8x512xf32, #tpu.memory_space<vmem>>, vector<8x256xf32>
    %50 = vector.broadcast %0 : vector<1x256xf32> to vector<8x256xf32>
    %51 = arith.mulf %50, %49 : vector<8x256xf32>
    %52 = arith.addf %48, %51 : vector<8x256xf32>
    %c0_38 = arith.constant 0 : index
    %c130 = arith.constant 130 : index
    %53 = vector.load %arg6[%c0_38, %c130] : memref<8x512xf32, #tpu.memory_space<vmem>>, vector<8x256xf32>
    %54 = vector.broadcast %3 : vector<1x256xf32> to vector<8x256xf32>
    %55 = arith.mulf %54, %53 : vector<8x256xf32>
    %56 = arith.addf %52, %55 : vector<8x256xf32>
    %c0_39 = arith.constant 0 : index
    %c96_40 = arith.constant 96 : index
    %57 = vector.load %arg7[%c0_39, %c96_40] : memref<8x512xf32, #tpu.memory_space<vmem>>, vector<8x256xf32>
    %c0_41 = arith.constant 0 : index
    %c112_42 = arith.constant 112 : index
    %58 = vector.load %arg7[%c0_41, %c112_42] : memref<8x512xf32, #tpu.memory_space<vmem>>, vector<8x256xf32>
    %59 = arith.addf %57, %58 : vector<8x256xf32>
    %c0_43 = arith.constant 0 : index
    %c128_44 = arith.constant 128 : index
    %60 = vector.load %arg7[%c0_43, %c128_44] : memref<8x512xf32, #tpu.memory_space<vmem>>, vector<8x256xf32>
    %61 = arith.addf %59, %60 : vector<8x256xf32>
    %c0_45 = arith.constant 0 : index
    %c144_46 = arith.constant 144 : index
    %62 = vector.load %arg7[%c0_45, %c144_46] : memref<8x512xf32, #tpu.memory_space<vmem>>, vector<8x256xf32>
    %63 = arith.addf %61, %62 : vector<8x256xf32>
    %c0_47 = arith.constant 0 : index
    %c160_48 = arith.constant 160 : index
    %64 = vector.load %arg7[%c0_47, %c160_48] : memref<8x512xf32, #tpu.memory_space<vmem>>, vector<8x256xf32>
    %65 = arith.addf %63, %64 : vector<8x256xf32>
    %c0_49 = arith.constant 0 : index
    %c111_50 = arith.constant 111 : index
    %66 = vector.load %arg7[%c0_49, %c111_50] : memref<8x512xf32, #tpu.memory_space<vmem>>, vector<8x256xf32>
    %c0_51 = arith.constant 0 : index
    %c127_52 = arith.constant 127 : index
    %67 = vector.load %arg7[%c0_51, %c127_52] : memref<8x512xf32, #tpu.memory_space<vmem>>, vector<8x256xf32>
    %68 = arith.addf %66, %67 : vector<8x256xf32>
    %c0_53 = arith.constant 0 : index
    %c143_54 = arith.constant 143 : index
    %69 = vector.load %arg7[%c0_53, %c143_54] : memref<8x512xf32, #tpu.memory_space<vmem>>, vector<8x256xf32>
    %70 = arith.addf %68, %69 : vector<8x256xf32>
    %c0_55 = arith.constant 0 : index
    %c113_56 = arith.constant 113 : index
    %71 = vector.load %arg7[%c0_55, %c113_56] : memref<8x512xf32, #tpu.memory_space<vmem>>, vector<8x256xf32>
    %c0_57 = arith.constant 0 : index
    %c129_58 = arith.constant 129 : index
    %72 = vector.load %arg7[%c0_57, %c129_58] : memref<8x512xf32, #tpu.memory_space<vmem>>, vector<8x256xf32>
    %73 = arith.addf %71, %72 : vector<8x256xf32>
    %c0_59 = arith.constant 0 : index
    %c145_60 = arith.constant 145 : index
    %74 = vector.load %arg7[%c0_59, %c145_60] : memref<8x512xf32, #tpu.memory_space<vmem>>, vector<8x256xf32>
    %75 = arith.addf %73, %74 : vector<8x256xf32>
    %76 = vector.broadcast %1 : vector<1x256xf32> to vector<8x256xf32>
    %77 = arith.mulf %76, %70 : vector<8x256xf32>
    %78 = arith.addf %65, %77 : vector<8x256xf32>
    %79 = vector.broadcast %2 : vector<1x256xf32> to vector<8x256xf32>
    %80 = arith.mulf %79, %75 : vector<8x256xf32>
    %81 = arith.addf %78, %80 : vector<8x256xf32>
    %c0_61 = arith.constant 0 : index
    %c126_62 = arith.constant 126 : index
    %82 = vector.load %arg7[%c0_61, %c126_62] : memref<8x512xf32, #tpu.memory_space<vmem>>, vector<8x256xf32>
    %83 = vector.broadcast %0 : vector<1x256xf32> to vector<8x256xf32>
    %84 = arith.mulf %83, %82 : vector<8x256xf32>
    %85 = arith.addf %81, %84 : vector<8x256xf32>
    %c0_63 = arith.constant 0 : index
    %c130_64 = arith.constant 130 : index
    %86 = vector.load %arg7[%c0_63, %c130_64] : memref<8x512xf32, #tpu.memory_space<vmem>>, vector<8x256xf32>
    %87 = vector.broadcast %3 : vector<1x256xf32> to vector<8x256xf32>
    %88 = arith.mulf %87, %86 : vector<8x256xf32>
    %89 = arith.addf %85, %88 : vector<8x256xf32>
    %cst_65 = arith.constant 7.700000e-02 : f32
    %90 = vector.broadcast %cst_65 : f32 to vector<8x256xf32>
    %91 = arith.mulf %90, %89 : vector<8x256xf32>
    %cst_66 = arith.constant 0.949999988 : f32
    %92 = vector.broadcast %cst_66 : f32 to vector<8x256xf32>
    %93 = arith.cmpf oge, %91, %92 : vector<8x256xf32>
    %cst_67 = arith.constant 1.000000e+00 : f32
    %cst_68 = arith.constant 0.000000e+00 : f32
    %94 = vector.broadcast %cst_67 : f32 to vector<8x256xf32>
    %95 = vector.broadcast %cst_68 : f32 to vector<8x256xf32>
    %96 = arith.select %93, %94, %95 : vector<8x256xi1>, vector<8x256xf32>
    %97 = arith.mulf %56, %96 : vector<8x256xf32>
    %c0_69 = arith.constant 0 : index
    %c0_70 = arith.constant 0 : index
    %98 = vector.load %arg4[%c0_69, %c0_70] : memref<8x256xf32, #tpu.memory_space<vmem>>, vector<8x256xf32>
    tpu.vector_store %arg4[%c0_69, %c0_70], %97 {strides = array<i32>} : memref<8x256xf32, #tpu.memory_space<vmem>>, vector<8x256xf32>,
    %c0_71 = arith.constant 0 : index
    %c0_72 = arith.constant 0 : index
    %99 = vector.load %arg5[%c0_71, %c0_72] : memref<8x256xf32, #tpu.memory_space<vmem>>, vector<8x256xf32>
    tpu.vector_store %arg5[%c0_71, %c0_72], %96 {strides = array<i32>} : memref<8x256xf32, #tpu.memory_space<vmem>>, vector<8x256xf32>,
    return
  }
  func.func @transform_0(%arg0: i32) -> (i32, i32) {
    %c0_i32 = arith.constant 0 : i32
    %c0_i32_0 = arith.constant 0 : i32
    %c0_i32_1 = arith.constant 0 : i32
    return %c0_i32, %c0_i32_0 : i32, i32
  }
  func.func @transform_1(%arg0: i32) -> (i32, i32) {
    %c0_i32 = arith.constant 0 : i32
    %c0_i32_0 = arith.constant 0 : i32
    return %arg0, %c0_i32 : i32, i32
  }
  func.func @transform_2(%arg0: i32) -> (i32, i32) {
    %c0_i32 = arith.constant 0 : i32
    %c0_i32_0 = arith.constant 0 : i32
    return %arg0, %c0_i32 : i32, i32
  }
  func.func @transform_3(%arg0: i32) -> (i32, i32) {
    %c0_i32 = arith.constant 0 : i32
    %c0_i32_0 = arith.constant 0 : i32
    return %arg0, %c0_i32 : i32, i32
  }
  func.func @transform_4(%arg0: i32) -> (i32, i32) {
    %c0_i32 = arith.constant 0 : i32
    %c0_i32_0 = arith.constant 0 : i32
    return %arg0, %c0_i32 : i32, i32
  }
}

</mosaic_0001>

<llo_original>
// kernel: tpu_custom_call.1
$region0: #{tpu_custom_call.1}
  #allocation0 [shape = 'u32[]', space=smem, size = 0x4, offset = 0x4, fixed_abs, tag = 'smem constant byte address 0x4 - core index']
  #allocation1 [shape = 'u32[144,128]{1,0:T(1,128)}', space=vmem, size = 0x12000, scoped, tag = 'internal scratch']
  #allocation2 [shape = 'f32[8,512]{1,0:T(8,128)}', space=vmem, size = 0x4000, scoped, tag = 'scratch operand']
  #allocation3 [shape = 'f32[8,512]{1,0:T(8,128)}', space=vmem, size = 0x4000, scoped, tag = 'scratch operand']
  %s0 = inlined_call_operand.hbm [shape: f32[4,256], index: 0, kind: input, shape index: {}]
  %s1 = inlined_call_operand.hbm [shape: f32[8,256], index: 1, kind: input, shape index: {}]
  %s2 = inlined_call_operand.hbm [shape: f32[8,256], index: 2, kind: input, shape index: {}]
  %s3 = inlined_call_operand.hbm [shape: f32[8,256], index: 3, kind: output, shape index: {0}]
  %s4 = inlined_call_operand.hbm [shape: f32[8,256], index: 4, kind: output, shape index: {1}]
  %5 = xla_tuple %s3, %s4
  %s6 = sld [smem:[#allocation0]]
  $region42: #{tpu_custom_call.1} parent=0
    _
  %s8 = ssub.s32 1, %s6
  %s9 = scalar_select 0, %s8, %s6
  $region1: #{tpu_custom_call.1} parent=0
    #allocation4 [shape = 'u8[4096]{0}', space=vmem, size = 0x1000, scoped, tag = 'input window, operand 0, single buffered']
    #allocation5 [shape = 's32[1]{0}', space=sflag, size = 0x4, scoped, tag = 'scoped memory for tpu_custom_call.1']
    #allocation6 [shape = 's32[1]{0}', space=sflag, size = 0x4, scoped, tag = 'scoped memory for tpu_custom_call.1']
    #allocation7 [shape = 'u8[8192]{0}', space=vmem, size = 0x2000, scoped, tag = 'input window, operand 1, single buffered']
    #allocation8 [shape = 's32[1]{0}', space=sflag, size = 0x4, scoped, tag = 'scoped memory for tpu_custom_call.1']
    #allocation9 [shape = 'u8[8192]{0}', space=vmem, size = 0x2000, scoped, tag = 'input window, operand 2, single buffered']
    #allocation10 [shape = 'u8[8192]{0}', space=vmem, size = 0x2000, scoped, tag = 'output window, operand 0, single buffered']
    #allocation11 [shape = 'u8[8192]{0}', space=vmem, size = 0x2000, scoped, tag = 'output window, operand 1, single buffered']
    #allocation12 [shape = 's32[1]{0}', space=sflag, size = 0x4, scoped, tag = 'scoped memory for tpu_custom_call.1']
    %10 = vsyncpa [#allocation5], 0
    %11 = vsyncpa [#allocation8], 0
    %12 = vsyncpa [#allocation6], 0
    %13 = vsyncpa [#allocation12], 0
    // Predicated region
    $region2: #{tpu_custom_call.1} parent=1 // pred_check
      _
    $region3: #{tpu_custom_call.1} parent=1 // pred_check_branch
      %15 = sbr.rel (0) target = $region5
    $region4: #{tpu_custom_call.1} parent=1 // pred_region
      %s17 = ssub.s32 128, 128
      %18 = vsyncadd [#allocation5], %s17
      %s20 = sshll.u32 [#allocation4], 4
      %s21 = int_to_ptr.vmem [resolvable:$true] %s20
      %23 = dma.hbm_to_vmem [thread:$0]  %s0, 128, %s21, [#allocation5]
    $region5: #{tpu_custom_call.1} parent=1 // pred_fallthru
      _
    // Predicated region
    $region6: #{tpu_custom_call.1} parent=1 // pred_check
      _
    $region7: #{tpu_custom_call.1} parent=1 // pred_check_branch
      %25 = sbr.rel (0) target = $region9
    $region8: #{tpu_custom_call.1} parent=1 // pred_region
      %s27 = ssub.s32 256, 256
      %28 = vsyncadd [#allocation8], %s27
      %s30 = sshll.u32 [#allocation7], 4
      %s31 = int_to_ptr.vmem [resolvable:$true] %s30
      %33 = dma.hbm_to_vmem [thread:$0]  %s1, 256, %s31, [#allocation8]
    $region9: #{tpu_custom_call.1} parent=1 // pred_fallthru
      _
    // Predicated region
    $region10: #{tpu_custom_call.1} parent=1 // pred_check
      _
    $region11: #{tpu_custom_call.1} parent=1 // pred_check_branch
      %35 = sbr.rel (0) target = $region13
    $region12: #{tpu_custom_call.1} parent=1 // pred_region
      %s37 = ssub.s32 256, 256
      %38 = vsyncadd [#allocation8], %s37
      %s40 = sshll.u32 [#allocation9], 4
      %s41 = int_to_ptr.vmem [resolvable:$true] %s40
      %43 = dma.hbm_to_vmem [thread:$0]  %s2, 256, %s41, [#allocation8]
    $region13: #{tpu_custom_call.1} parent=1 // pred_fallthru
      _
    // Predicated region
    $region14: #{tpu_custom_call.1} parent=1 // pred_check
      _
    $region15: #{tpu_custom_call.1} parent=1 // pred_check_branch
      %45 = sbr.rel (0) target = $region17
    $region16: #{tpu_custom_call.1} parent=1 // pred_region
      %46 = dma.done [#allocation5], 128
    $region17: #{tpu_custom_call.1} parent=1 // pred_fallthru
      _
    // Predicated region
    $region18: #{tpu_custom_call.1} parent=1 // pred_check
      _
    $region19: #{tpu_custom_call.1} parent=1 // pred_check_branch
      %48 = sbr.rel (0) target = $region21
    $region20: #{tpu_custom_call.1} parent=1 // pred_region
      %49 = dma.done [#allocation8], 256
    $region21: #{tpu_custom_call.1} parent=1 // pred_fallthru
      _
    // Predicated region
    $region22: #{tpu_custom_call.1} parent=1 // pred_check
      _
    $region23: #{tpu_custom_call.1} parent=1 // pred_check_branch
      %51 = sbr.rel (0) target = $region25
    $region24: #{tpu_custom_call.1} parent=1 // pred_region
      %52 = dma.done [#allocation8], 256
    $region25: #{tpu_custom_call.1} parent=1 // pred_fallthru
      _
    %v53 = vld [vmem:[#allocation4] ss:$4 sm:$0x3]
    %s54 = scalar_lea.vmem [#allocation4], 1
    %v55 = vld [vmem:[%s54] ss:$4 sm:$0x3]
    %s56 = scalar_lea.vmem [#allocation4], 2
    %v57 = vld [vmem:[%s56] ss:$4 sm:$0x3]
    %s58 = scalar_lea.vmem [#allocation4], 3
    %v59 = vld [vmem:[%s58] ss:$4 sm:$0x3]
    %60 = vst [vmem:[#allocation2] sm:$0xff] 0.0
    %61 = vst [vmem:[#allocation2 + $0x18] sm:$0xff] 0.0
    %v62 = vld [vmem:[#allocation7] sm:$0xff]
    %v63 = vld [vmem:[#allocation7 + $0x8] sm:$0xff]
    %64 = vst [vmem:[#allocation2 + $0x8] sm:$0xff] %v62
    %65 = vst [vmem:[#allocation2 + $0x10] sm:$0xff] %v63
    %66 = vst [vmem:[#allocation3] sm:$0xff] 0.0
    %67 = vst [vmem:[#allocation3 + $0x18] sm:$0xff] 0.0
    %v68 = vld [vmem:[#allocation9] sm:$0xff]
    %v69 = vld [vmem:[#allocation9 + $0x8] sm:$0xff]
    %70 = vst [vmem:[#allocation3 + $0x8] sm:$0xff] %v68
    %71 = vst [vmem:[#allocation3 + $0x10] sm:$0xff] %v69
    %v72 = vld [vmem:[#allocation2] sm:$0xff]
    %v73 = vld [vmem:[#allocation2 + $0x8] sm:$0xff]
    %v74 = vld [vmem:[#allocation2 + $0x10] sm:$0xff]
    %v75 = vld [vmem:[#allocation2 + $0x8] sm:$0xff]
    %v76 = vld [vmem:[#allocation2 + $0x10] sm:$0xff]
    %v77 = vld [vmem:[#allocation2 + $0x18] sm:$0xff]
    %81 = vrot.lane.b32.xlu0 %v75, 64
    %v82 = vpop.permute.xlu0 %81
    %83 = vrot.lane.b32.xlu0 %v76, 64
    %v84 = vpop.permute.xlu0 %83
    %85 = vrot.lane.b32.xlu0 %v77, 64
    %v86 = vpop.permute.xlu0 %85
    %vm87 = vcmask 523264
    %v88 = vsel %vm87, %v82, %v84
    %v89 = vsel %vm87, %v84, %v86
    %v93 = vadd.f32 %v72, %v82
    %v94 = vadd.f32 %v73, %v88
    %v95 = vadd.f32 %v74, %v89
    %96 = vrot.lane.b32.xlu0 %v75, 96
    %v97 = vpop.permute.xlu0 %96
    %98 = vrot.lane.b32.xlu0 %v76, 96
    %v99 = vpop.permute.xlu0 %98
    %100 = vrot.lane.b32.xlu0 %v77, 96
    %v101 = vpop.permute.xlu0 %100
    %vm102 = vcmask 785408
    %v103 = vsel %vm102, %v97, %v99
    %v104 = vsel %vm102, %v99, %v101
    %v108 = vadd.f32 %v72, %v97
    %v109 = vadd.f32 %v73, %v103
    %v110 = vadd.f32 %v74, %v104
    %v111 = vmul.f32 %v108, 2.0
    %v112 = vmul.f32 %v109, 2.0
    %v113 = vmul.f32 %v110, 2.0
    %117 = vrot.lane.b32.xlu0 %v111, 112
    %v118 = vpop.permute.xlu0 %117
    %119 = vrot.lane.b32.xlu0 %v112, 112
    %v120 = vpop.permute.xlu0 %119
    %121 = vrot.lane.b32.xlu0 %v113, 112
    %v122 = vpop.permute.xlu0 %121
    %vm123 = vcmask 916480
    %v124 = vsel %vm123, %v118, %v120
    %v125 = vsel %vm123, %v120, %v122
    %v129 = vadd.f32 %v93, %v124
    %v130 = vadd.f32 %v94, %v125
    %v131 = vadd.f32 %v95, %v122
    %v132 = vmul.f32 %v73, 16.0
    %v133 = vmul.f32 %v74, 16.0
    %136 = vrot.lane.b32.xlu0 %v132, 96
    %v137 = vpop.permute.xlu0 %136
    %138 = vrot.lane.b32.xlu0 %v133, 96
    %v139 = vpop.permute.xlu0 %138
    %v140 = vsel %vm102, %v137, %v139
    %v144 = vsub.f32 %v129, %v137
    %v145 = vsub.f32 %v130, %v140
    %v146 = vsub.f32 %v131, %v139
    %v147 = vmul.f32 %v72, 2.0
    %v148 = vmul.f32 %v73, 2.0
    %v149 = vmul.f32 %v74, 2.0
    %153 = vrot.lane.b32.xlu0 %v147, 112
    %v154 = vpop.permute.xlu0 %153
    %155 = vrot.lane.b32.xlu0 %v148, 112
    %v156 = vpop.permute.xlu0 %155
    %157 = vrot.lane.b32.xlu0 %v149, 112
    %v158 = vpop.permute.xlu0 %157
    %v159 = vsel %vm123, %v154, %v156
    %v160 = vsel %vm123, %v156, %v158
    %v164 = vadd.f32 %v108, %v159
    %v165 = vadd.f32 %v109, %v160
    %v166 = vadd.f32 %v110, %v158
    %v167 = vmul.f32 %v75, 2.0
    %v168 = vmul.f32 %v76, 2.0
    %v169 = vmul.f32 %v77, 2.0
    %173 = vrot.lane.b32.xlu0 %v167, 112
    %v174 = vpop.permute.xlu0 %173
    %175 = vrot.lane.b32.xlu0 %v168, 112
    %v176 = vpop.permute.xlu0 %175
    %177 = vrot.lane.b32.xlu0 %v169, 112
    %v178 = vpop.permute.xlu0 %177
    %v179 = vsel %vm123, %v174, %v176
    %v180 = vsel %vm123, %v176, %v178
    %v184 = vadd.f32 %v108, %v174
    %v185 = vadd.f32 %v109, %v179
    %v186 = vadd.f32 %v110, %v180
    %v188 = vlaneseq
    %v189 = vshrl.u32 %v188, 7
    %v190 = vsub.s32 0, %v189
    %v191 = vrot.slane %v55, %v190
    %v192 = vlaneseq
    %v193 = vshrl.u32 %v192, 7
    %v194 = vsub.s32 1, %v193
    %v195 = vrot.slane %v55, %v194
    %201 = vrot.lane.b32.xlu0 %v164, 17
    %v202 = vpop.permute.xlu0 %201
    %203 = vrot.lane.b32.xlu0 %v165, 17
    %v204 = vpop.permute.xlu0 %203
    %205 = vrot.lane.b32.xlu0 %v166, 17
    %v206 = vpop.permute.xlu0 %205
    %vm207 = vcmask 138240
    %v208 = vsel %vm207, %v202, %v204
    %v209 = vsel %vm207, %v204, %v206
    %v212 = vmul.f32 %v191, %v208
    %v213 = vmul.f32 %v195, %v209
    %216 = vrot.lane.b32.xlu0 %v212, 96
    %v217 = vpop.permute.xlu0 %216
    %218 = vrot.lane.b32.xlu0 %v213, 96
    %v219 = vpop.permute.xlu0 %218
    %v220 = vsel %vm102, %v217, %v219
    %v224 = vadd.f32 %v144, %v217
    %v225 = vadd.f32 %v145, %v220
    %v226 = vadd.f32 %v146, %v219
    %v228 = vlaneseq
    %v229 = vshrl.u32 %v228, 7
    %v230 = vsub.s32 0, %v229
    %v231 = vrot.slane %v57, %v230
    %v232 = vlaneseq
    %v233 = vshrl.u32 %v232, 7
    %v234 = vsub.s32 1, %v233
    %v235 = vrot.slane %v57, %v234
    %241 = vrot.lane.b32.xlu0 %v184, 15
    %v242 = vpop.permute.xlu0 %241
    %243 = vrot.lane.b32.xlu0 %v185, 15
    %v244 = vpop.permute.xlu0 %243
    %245 = vrot.lane.b32.xlu0 %v186, 15
    %v246 = vpop.permute.xlu0 %245
    %vm247 = vcmask 121856
    %v248 = vsel %vm247, %v242, %v244
    %v249 = vsel %vm247, %v244, %v246
    %v252 = vmul.f32 %v231, %v248
    %v253 = vmul.f32 %v235, %v249
    %256 = vrot.lane.b32.xlu0 %v252, 96
    %v257 = vpop.permute.xlu0 %256
    %258 = vrot.lane.b32.xlu0 %v253, 96
    %v259 = vpop.permute.xlu0 %258
    %v260 = vsel %vm102, %v257, %v259
    %v264 = vadd.f32 %v224, %v257
    %v265 = vadd.f32 %v225, %v260
    %v266 = vadd.f32 %v226, %v259
    %v268 = vlaneseq
    %v269 = vshrl.u32 %v268, 7
    %v270 = vsub.s32 0, %v269
    %v271 = vrot.slane %v53, %v270
    %v272 = vlaneseq
    %v273 = vshrl.u32 %v272, 7
    %v274 = vsub.s32 1, %v273
    %v275 = vrot.slane %v53, %v274
    %281 = vrot.lane.b32.xlu0 %v72, 2
    %v282 = vpop.permute.xlu0 %281
    %283 = vrot.lane.b32.xlu0 %v73, 2
    %v284 = vpop.permute.xlu0 %283
    %285 = vrot.lane.b32.xlu0 %v74, 2
    %v286 = vpop.permute.xlu0 %285
    %vm287 = vcmask 15360
    %v288 = vsel %vm287, %v282, %v284
    %v289 = vsel %vm287, %v284, %v286
    %v292 = vmul.f32 %v271, %v288
    %v293 = vmul.f32 %v275, %v289
    %296 = vrot.lane.b32.xlu0 %v292, 96
    %v297 = vpop.permute.xlu0 %296
    %298 = vrot.lane.b32.xlu0 %v293, 96
    %v299 = vpop.permute.xlu0 %298
    %v300 = vsel %vm102, %v297, %v299
    %v304 = vadd.f32 %v264, %v297
    %v305 = vadd.f32 %v265, %v300
    %v306 = vadd.f32 %v266, %v299
    %v308 = vlaneseq
    %v309 = vshrl.u32 %v308, 7
    %v310 = vsub.s32 0, %v309
    %v311 = vrot.slane %v59, %v310
    %v312 = vlaneseq
    %v313 = vshrl.u32 %v312, 7
    %v314 = vsub.s32 1, %v313
    %v315 = vrot.slane %v59, %v314
    %318 = vrot.lane.b32.xlu0 %v75, 126
    %v319 = vpop.permute.xlu0 %318
    %320 = vrot.lane.b32.xlu0 %v76, 126
    %v321 = vpop.permute.xlu0 %320
    %322 = vrot.lane.b32.xlu0 %v77, 126
    %v323 = vpop.permute.xlu0 %322
    %vm324 = vcmask 1031168
    %v325 = vsel %vm324, %v319, %v321
    %v326 = vsel %vm324, %v321, %v323
    %v329 = vmul.f32 %v311, %v325
    %v330 = vmul.f32 %v315, %v326
    %333 = vrot.lane.b32.xlu0 %v329, 96
    %v334 = vpop.permute.xlu0 %333
    %335 = vrot.lane.b32.xlu0 %v330, 96
    %v336 = vpop.permute.xlu0 %335
    %v337 = vsel %vm102, %v334, %v336
    %v341 = vadd.f32 %v304, %v334
    %v342 = vadd.f32 %v305, %v337
    %v343 = vadd.f32 %v306, %v336
    %v344 = vld [vmem:[#allocation3] sm:$0xff]
    %v345 = vld [vmem:[#allocation3 + $0x8] sm:$0xff]
    %v346 = vld [vmem:[#allocation3 + $0x10] sm:$0xff]
    %350 = vrot.lane.b32.xlu0 %v344, 112
    %v351 = vpop.permute.xlu0 %350
    %352 = vrot.lane.b32.xlu0 %v345, 112
    %v353 = vpop.permute.xlu0 %352
    %354 = vrot.lane.b32.xlu0 %v346, 112
    %v355 = vpop.permute.xlu0 %354
    %v356 = vsel %vm123, %v351, %v353
    %v357 = vsel %vm123, %v353, %v355
    %v361 = vadd.f32 %v344, %v356
    %v362 = vadd.f32 %v345, %v357
    %v363 = vadd.f32 %v346, %v355
    %364 = vrot.lane.b32.xlu0 %v345, 96
    %v365 = vpop.permute.xlu0 %364
    %366 = vrot.lane.b32.xlu0 %v346, 96
    %v367 = vpop.permute.xlu0 %366
    %v368 = vsel %vm102, %v365, %v367
    %v372 = vadd.f32 %v361, %v365
    %v373 = vadd.f32 %v362, %v368
    %v374 = vadd.f32 %v363, %v367
    %v375 = vld [vmem:[#allocation3 + $0x8] sm:$0xff]
    %v376 = vld [vmem:[#allocation3 + $0x10] sm:$0xff]
    %v377 = vld [vmem:[#allocation3 + $0x18] sm:$0xff]
    %381 = vrot.lane.b32.xlu0 %v375, 80
    %v382 = vpop.permute.xlu0 %381
    %383 = vrot.lane.b32.xlu0 %v376, 80
    %v384 = vpop.permute.xlu0 %383
    %385 = vrot.lane.b32.xlu0 %v377, 80
    %v386 = vpop.permute.xlu0 %385
    %vm387 = vcmask 654336
    %v388 = vsel %vm387, %v382, %v384
    %v389 = vsel %vm387, %v384, %v386
    %v393 = vadd.f32 %v372, %v382
    %v394 = vadd.f32 %v373, %v388
    %v395 = vadd.f32 %v374, %v389
    %396 = vrot.lane.b32.xlu0 %v375, 64
    %v397 = vpop.permute.xlu0 %396
    %398 = vrot.lane.b32.xlu0 %v376, 64
    %v399 = vpop.permute.xlu0 %398
    %400 = vrot.lane.b32.xlu0 %v377, 64
    %v401 = vpop.permute.xlu0 %400
    %v402 = vsel %vm87, %v397, %v399
    %v403 = vsel %vm87, %v399, %v401
    %v407 = vadd.f32 %v393, %v397
    %v408 = vadd.f32 %v394, %v402
    %v409 = vadd.f32 %v395, %v403
    %410 = vrot.lane.b32.xlu0 %v375, 96
    %v411 = vpop.permute.xlu0 %410
    %412 = vrot.lane.b32.xlu0 %v376, 96
    %v413 = vpop.permute.xlu0 %412
    %414 = vrot.lane.b32.xlu0 %v377, 96
    %v415 = vpop.permute.xlu0 %414
    %v416 = vsel %vm102, %v411, %v413
    %v417 = vsel %vm102, %v413, %v415
    %v421 = vadd.f32 %v361, %v411
    %v422 = vadd.f32 %v362, %v416
    %v423 = vadd.f32 %v363, %v417
    %424 = vrot.lane.b32.xlu0 %v375, 112
    %v425 = vpop.permute.xlu0 %424
    %426 = vrot.lane.b32.xlu0 %v376, 112
    %v427 = vpop.permute.xlu0 %426
    %428 = vrot.lane.b32.xlu0 %v377, 112
    %v429 = vpop.permute.xlu0 %428
    %v430 = vsel %vm123, %v425, %v427
    %v431 = vsel %vm123, %v427, %v429
    %v435 = vadd.f32 %v344, %v425
    %v436 = vadd.f32 %v345, %v430
    %v437 = vadd.f32 %v346, %v431
    %v438 = vadd.f32 %v435, %v411
    %v439 = vadd.f32 %v436, %v416
    %v440 = vadd.f32 %v437, %v417
    %444 = vrot.lane.b32.xlu0 %v421, 17
    %v445 = vpop.permute.xlu0 %444
    %446 = vrot.lane.b32.xlu0 %v422, 17
    %v447 = vpop.permute.xlu0 %446
    %448 = vrot.lane.b32.xlu0 %v423, 17
    %v449 = vpop.permute.xlu0 %448
    %v450 = vsel %vm207, %v445, %v447
    %v451 = vsel %vm207, %v447, %v449
    %v454 = vmul.f32 %v191, %v450
    %v455 = vmul.f32 %v195, %v451
    %458 = vrot.lane.b32.xlu0 %v454, 96
    %v459 = vpop.permute.xlu0 %458
    %460 = vrot.lane.b32.xlu0 %v455, 96
    %v461 = vpop.permute.xlu0 %460
    %v462 = vsel %vm102, %v459, %v461
    %v466 = vadd.f32 %v407, %v459
    %v467 = vadd.f32 %v408, %v462
    %v468 = vadd.f32 %v409, %v461
    %472 = vrot.lane.b32.xlu0 %v438, 15
    %v473 = vpop.permute.xlu0 %472
    %474 = vrot.lane.b32.xlu0 %v439, 15
    %v475 = vpop.permute.xlu0 %474
    %476 = vrot.lane.b32.xlu0 %v440, 15
    %v477 = vpop.permute.xlu0 %476
    %v478 = vsel %vm247, %v473, %v475
    %v479 = vsel %vm247, %v475, %v477
    %v482 = vmul.f32 %v231, %v478
    %v483 = vmul.f32 %v235, %v479
    %486 = vrot.lane.b32.xlu0 %v482, 96
    %v487 = vpop.permute.xlu0 %486
    %488 = vrot.lane.b32.xlu0 %v483, 96
    %v489 = vpop.permute.xlu0 %488
    %v490 = vsel %vm102, %v487, %v489
    %v494 = vadd.f32 %v466, %v487
    %v495 = vadd.f32 %v467, %v490
    %v496 = vadd.f32 %v468, %v489
    %497 = vrot.lane.b32.xlu0 %v344, 2
    %v498 = vpop.permute.xlu0 %497
    %499 = vrot.lane.b32.xlu0 %v345, 2
    %v500 = vpop.permute.xlu0 %499
    %501 = vrot.lane.b32.xlu0 %v346, 2
    %v502 = vpop.permute.xlu0 %501
    %v503 = vsel %vm287, %v498, %v500
    %v504 = vsel %vm287, %v500, %v502
    %v507 = vmul.f32 %v271, %v503
    %v508 = vmul.f32 %v275, %v504
    %511 = vrot.lane.b32.xlu0 %v507, 96
    %v512 = vpop.permute.xlu0 %511
    %513 = vrot.lane.b32.xlu0 %v508, 96
    %v514 = vpop.permute.xlu0 %513
    %v515 = vsel %vm102, %v512, %v514
    %v519 = vadd.f32 %v494, %v512
    %v520 = vadd.f32 %v495, %v515
    %v521 = vadd.f32 %v496, %v514
    %522 = vrot.lane.b32.xlu0 %v375, 126
    %v523 = vpop.permute.xlu0 %522
    %524 = vrot.lane.b32.xlu0 %v376, 126
    %v525 = vpop.permute.xlu0 %524
    %526 = vrot.lane.b32.xlu0 %v377, 126
    %v527 = vpop.permute.xlu0 %526
    %v528 = vsel %vm324, %v523, %v525
    %v529 = vsel %vm324, %v525, %v527
    %v532 = vmul.f32 %v311, %v528
    %v533 = vmul.f32 %v315, %v529
    %536 = vrot.lane.b32.xlu0 %v532, 96
    %v537 = vpop.permute.xlu0 %536
    %538 = vrot.lane.b32.xlu0 %v533, 96
    %v539 = vpop.permute.xlu0 %538
    %v540 = vsel %vm102, %v537, %v539
    %v544 = vadd.f32 %v519, %v537
    %v545 = vadd.f32 %v520, %v540
    %v546 = vadd.f32 %v521, %v539
    %v547 = vmul.f32 %v544, 0.077
    %v548 = vmul.f32 %v545, 0.077
    %v549 = vmul.f32 %v546, 0.077
    %vm550 = vcmp.ge.f32.partialorder %v547, 0.95
    %vm551 = vcmp.ge.f32.partialorder %v548, 0.95
    %vm552 = vcmp.ge.f32.partialorder %v549, 0.95
    %v553 = vsel %vm550, 1.0, 0.0
    %v554 = vsel %vm551, 1.0, 0.0
    %v555 = vsel %vm552, 1.0, 0.0
    %v556 = vmul.f32 %v341, %v553
    %v557 = vmul.f32 %v342, %v554
    %v558 = vmul.f32 %v343, %v555
    %562 = vrot.lane.b32.xlu0 %v556, 32
    %v563 = vpop.permute.xlu0 %562
    %564 = vrot.lane.b32.xlu0 %v557, 32
    %v565 = vpop.permute.xlu0 %564
    %566 = vrot.lane.b32.xlu0 %v558, 32
    %v567 = vpop.permute.xlu0 %566
    %vm568 = vcmask 261120
    %v569 = vsel %vm568, %v563, %v565
    %v570 = vsel %vm568, %v565, %v567
    %573 = vst [vmem:[#allocation10] sm:$0xff] %v569
    %574 = vst [vmem:[#allocation10 + $0x8] sm:$0xff] %v570
    %578 = vrot.lane.b32.xlu0 %v553, 32
    %v579 = vpop.permute.xlu0 %578
    %580 = vrot.lane.b32.xlu0 %v554, 32
    %v581 = vpop.permute.xlu0 %580
    %582 = vrot.lane.b32.xlu0 %v555, 32
    %v583 = vpop.permute.xlu0 %582
    %v584 = vsel %vm568, %v579, %v581
    %v585 = vsel %vm568, %v581, %v583
    %588 = vst [vmem:[#allocation11] sm:$0xff] %v584
    %589 = vst [vmem:[#allocation11 + $0x8] sm:$0xff] %v585
    // Predicated region
    $region26: #{tpu_custom_call.1} parent=1 // pred_check
      _
    $region27: #{tpu_custom_call.1} parent=1 // pred_check_branch
      %591 = sbr.rel (0) target = $region29
    $region28: #{tpu_custom_call.1} parent=1 // pred_region
      %s593 = ssub.s32 256, 256
      %594 = vsyncadd [#allocation6], %s593
      %s596 = sshll.u32 [#allocation10], 4
      %s597 = int_to_ptr.vmem [resolvable:$true] %s596
      %599 = dma.vmem_to_hbm [thread:$0]  %s597, 256, %s3, [#allocation6]
    $region29: #{tpu_custom_call.1} parent=1 // pred_fallthru
      _
    // Predicated region
    $region30: #{tpu_custom_call.1} parent=1 // pred_check
      _
    $region31: #{tpu_custom_call.1} parent=1 // pred_check_branch
      %601 = sbr.rel (0) target = $region33
    $region32: #{tpu_custom_call.1} parent=1 // pred_region
      %s603 = ssub.s32 256, 256
      %604 = vsyncadd [#allocation12], %s603
      %s606 = sshll.u32 [#allocation11], 4
      %s607 = int_to_ptr.vmem [resolvable:$true] %s606
      %609 = dma.vmem_to_hbm [thread:$0]  %s607, 256, %s4, [#allocation12]
    $region33: #{tpu_custom_call.1} parent=1 // pred_fallthru
      _
    // Predicated region
    $region34: #{tpu_custom_call.1} parent=1 // pred_check
      _
    $region35: #{tpu_custom_call.1} parent=1 // pred_check_branch
      %611 = sbr.rel (0) target = $region37
    $region36: #{tpu_custom_call.1} parent=1 // pred_region
      %612 = dma.done [#allocation6], 256
    $region37: #{tpu_custom_call.1} parent=1 // pred_fallthru
      _
    // Predicated region
    $region38: #{tpu_custom_call.1} parent=1 // pred_check
      _
    $region39: #{tpu_custom_call.1} parent=1 // pred_check_branch
      %614 = sbr.rel (0) target = $region41
    $region40: #{tpu_custom_call.1} parent=1 // pred_region
      %615 = dma.done [#allocation12], 256
    $region41: #{tpu_custom_call.1} parent=1 // pred_fallthru
      _
    %616 = vsyncpa [#allocation5], 1
    %617 = vsyncpa [#allocation8], 1
    %618 = vsyncpa [#allocation6], 1
    %619 = vsyncpa [#allocation12], 1

</llo_original>
